<compile_context>
chip_gen: v5e
topology: v5e:2x2
jax: 0.10.0
libtpu: 0.0.40
codegen_flags: <defaults>
</compile_context>

<pallas_src>
import functools

import jax
import jax.numpy as jnp
from jax.experimental import pallas as pl
from jax.experimental.pallas import tpu as pltpu

N_IN, N_H1, N_H2, N_OUT = 2, 5, 5, 1


def _round_up(n, m):
    return ((n + m - 1) // m) * m


def threelayer_kernel(w1_ref, b1_ref, w2_ref, b2_ref, w3_ref, b3_ref,
                      x_ref, o_ref):
    # x_ref: [N_IN, TS, 128] sublane-dense feature-major block.
    # Weights/biases are flat SMEM arrays read as scalars.
    x_rows = [x_ref[i] for i in range(N_IN)]          # each [TS, 128] f32

    # Layer 1: h_j = relu(sum_i x_i * w1[j, i] + b1[j])      (5 hidden units)
    h = []
    for j in range(N_H1):
        acc = x_rows[0] * w1_ref[j * N_IN + 0]
        for i in range(1, N_IN):
            acc = acc + x_rows[i] * w1_ref[j * N_IN + i]
        h.append(jnp.maximum(acc + b1_ref[j], 0.0))

    # Layer 2: g_j = relu(sum_k h_k * w2[j, k] + b2[j])      (5 hidden units)
    g = []
    for j in range(N_H2):
        acc = h[0] * w2_ref[j * N_H1 + 0]
        for k in range(1, N_H1):
            acc = acc + h[k] * w2_ref[j * N_H1 + k]
        g.append(jnp.maximum(acc + b2_ref[j], 0.0))

    # Output: y = sigmoid(sum_k g_k * w3[k] + b3)            (1 unit)
    y = g[0] * w3_ref[0]
    for k in range(1, N_H2):
        y = y + g[k] * w3_ref[k]
    y = y + b3_ref[0]

    o_ref[0] = jax.nn.sigmoid(y).astype(o_ref.dtype)          # [TS, 128]


@functools.partial(jax.jit, static_argnames=("target_rows",))
def threelayer_forward(x, w1, b1, w2, b2, w3, b3, *, target_rows=1024):
    """x: [B, 2]; w1: [5, 2]; b1: [5]; w2: [5, 5]; b2: [5]; w3: [1, 5]; b3: [1]
    (PyTorch nn.Linear layouts).  Returns [B, 1]."""
    B = x.shape[0]

    # Sublane-row tiling of the batch: 128 batch elements per lane-row,
    # TS rows (multiple of 8) per grid step  ->  TS*128 elems / ~TS/2 KB input.
    s_needed = pl.cdiv(B, 128)                      # rows needed for the batch
    TS = min(_round_up(target_rows, 8), _round_up(s_needed, 8))
    if s_needed >= 16:
        # Keep >= 2 grid steps when the batch allows it (v7x megacore sharding).
        TS = min(TS, _round_up(pl.cdiv(s_needed, 2), 8))
    S = _round_up(s_needed, TS)
    Bp = S * 128
    grid = S // TS

    # Feature-major, zero-padded, sublane-dense batch:  [N_IN, S, 128]
    x_fm = (jnp.zeros((N_IN, Bp), x.dtype)
            .at[:, :B].set(x.T)
            .reshape(N_IN, S, 128))

    smem_spec = lambda: pl.BlockSpec(memory_space=pltpu.MemorySpace.SMEM)

    out_fm = pl.pallas_call(
        threelayer_kernel,
        out_shape=jax.ShapeDtypeStruct((N_OUT, S, 128), x.dtype),
        grid=(grid,),
        in_specs=[
            smem_spec(),                                         # w1 flat (10,)
            smem_spec(),                                         # b1 (5,)
            smem_spec(),                                         # w2 flat (25,)
            smem_spec(),                                         # b2 (5,)
            smem_spec(),                                         # w3 flat (5,)
            smem_spec(),                                         # b3 (1,)
            pl.BlockSpec((N_IN, TS, 128), lambda i: (0, i, 0)),  # x block
        ],
        out_specs=pl.BlockSpec((N_OUT, TS, 128), lambda i: (0, i, 0)),
        compiler_params=pltpu.CompilerParams(
            dimension_semantics=("parallel",)),
    )(w1.reshape(-1), b1, w2.reshape(-1), b2, w3.reshape(-1), b3, x_fm)

    # [1, S, 128] -> [Bp, 1] is a pure reshape (no transpose), then slice.
    return out_fm.reshape(Bp, N_OUT)[:B]


def init_params(key):
    """Mirror the module's __init__: kaiming_normal_ weights (std=sqrt(2/fan_in)),
    PyTorch-default uniform(-1/sqrt(fan_in), 1/sqrt(fan_in)) biases."""
    k1, k2, k3, k4, k5, k6 = jax.random.split(key, 6)
    w1 = jax.random.normal(k1, (N_H1, N_IN), jnp.float32) * jnp.sqrt(2.0 / N_IN)
    b1 = jax.random.uniform(k2, (N_H1,), jnp.float32,
                            minval=-1.0 / jnp.sqrt(N_IN), maxval=1.0 / jnp.sqrt(N_IN))
    w2 = jax.random.normal(k3, (N_H2, N_H1), jnp.float32) * jnp.sqrt(2.0 / N_H1)
    b2 = jax.random.uniform(k4, (N_H2,), jnp.float32,
                            minval=-1.0 / jnp.sqrt(N_H1), maxval=1.0 / jnp.sqrt(N_H1))
    w3 = jax.random.normal(k5, (N_OUT, N_H2), jnp.float32) * jnp.sqrt(2.0 / N_H2)
    b3 = jax.random.uniform(k6, (N_OUT,), jnp.float32,
                            minval=-1.0 / jnp.sqrt(N_H2), maxval=1.0 / jnp.sqrt(N_H2))
    return w1, b1, w2, b2, w3, b3


def _reference(x, w1, b1, w2, b2, w3, b3):
    h = jnp.maximum(x @ w1.T + b1, 0.0)
    g = jnp.maximum(h @ w2.T + b2, 0.0)
    return jax.nn.sigmoid(g @ w3.T + b3)


if __name__ == "__main__":
    key = jax.random.PRNGKey(0)
    kx, kx2, kp = jax.random.split(key, 3)
    w1, b1, w2, b2, w3, b3 = init_params(kp)

    # Small batch (module's natural use case).
    B = 8
    x = jax.random.normal(kx, (B, N_IN), jnp.float32)
    out = jax.block_until_ready(threelayer_forward(x, w1, b1, w2, b2, w3, b3))
    ref = _reference(x, w1, b1, w2, b2, w3, b3)
    assert out.shape == (B, 1)
    assert jnp.allclose(out, ref, atol=1e-5, rtol=1e-5)

    # Larger (still modest) batch to exercise the multi-step, padded grid path.
    B2 = 2000
    x2 = jax.random.normal(kx2, (B2, N_IN), jnp.float32)
    out2 = jax.block_until_ready(threelayer_forward(x2, w1, b1, w2, b2, w3, b3))
    ref2 = _reference(x2, w1, b1, w2, b2, w3, b3)
    assert out2.shape == (B2, 1)
    assert jnp.allclose(out2, ref2, atol=1e-5, rtol=1e-5)

    print("KERNEL_OK")
</pallas_src>

<mosaic_0001>
module attributes {stable_mosaic.version = 11 : i64} {
  func.func @threelayer_kernel(%arg0: i32, %arg1: memref<10xf32, #tpu.memory_space<smem>>, %arg2: memref<5xf32, #tpu.memory_space<smem>>, %arg3: memref<25xf32, #tpu.memory_space<smem>>, %arg4: memref<5xf32, #tpu.memory_space<smem>>, %arg5: memref<5xf32, #tpu.memory_space<smem>>, %arg6: memref<1xf32, #tpu.memory_space<smem>>, %arg7: memref<2x8x128xf32, #tpu.memory_space<vmem>>, %arg8: memref<1x8x128xf32, #tpu.memory_space<vmem>>) attributes {dimension_semantics = [#tpu.dimension_semantics<parallel>], iteration_bounds = array<i64: 1>, scalar_prefetch = 0 : i64, scratch_operands = 0 : i64, tpu.core_type = #tpu.core_type<tc>, window_params = [{transform_indices = @transform_0, window_bounds = array<i64: 10>}, {transform_indices = @transform_1, window_bounds = array<i64: 5>}, {transform_indices = @transform_2, window_bounds = array<i64: 25>}, {transform_indices = @transform_3, window_bounds = array<i64: 5>}, {transform_indices = @transform_4, window_bounds = array<i64: 5>}, {transform_indices = @transform_5, window_bounds = array<i64: 1>}, {transform_indices = @transform_6, window_bounds = array<i64: 2, 8, 128>}, {transform_indices = @transform_7, window_bounds = array<i64: 1, 8, 128>}]} {
    %c0 = arith.constant 0 : index
    %c0_0 = arith.constant 0 : index
    %c0_1 = arith.constant 0 : index
    %0 = vector.load %arg7[%c0, %c0_0, %c0_1] : memref<2x8x128xf32, #tpu.memory_space<vmem>>, vector<1x8x128xf32>
    %1 = vector.shape_cast %0 : vector<1x8x128xf32> to vector<8x128xf32>
    %c1 = arith.constant 1 : index
    %c0_2 = arith.constant 0 : index
    %c0_3 = arith.constant 0 : index
    %2 = vector.load %arg7[%c1, %c0_2, %c0_3] : memref<2x8x128xf32, #tpu.memory_space<vmem>>, vector<1x8x128xf32>
    %3 = vector.shape_cast %2 : vector<1x8x128xf32> to vector<8x128xf32>
    %c0_4 = arith.constant 0 : index
    %4 = memref.load %arg1[%c0_4] : memref<10xf32, #tpu.memory_space<smem>>
    %5 = vector.broadcast %4 : f32 to vector<8x128xf32>
    %6 = arith.mulf %1, %5 : vector<8x128xf32>
    %c1_5 = arith.constant 1 : index
    %7 = memref.load %arg1[%c1_5] : memref<10xf32, #tpu.memory_space<smem>>
    %8 = vector.broadcast %7 : f32 to vector<8x128xf32>
    %9 = arith.mulf %3, %8 : vector<8x128xf32>
    %10 = arith.addf %6, %9 : vector<8x128xf32>
    %c0_6 = arith.constant 0 : index
    %11 = memref.load %arg2[%c0_6] : memref<5xf32, #tpu.memory_space<smem>>
    %12 = vector.broadcast %11 : f32 to vector<8x128xf32>
    %13 = arith.addf %10, %12 : vector<8x128xf32>
    %cst = arith.constant 0.000000e+00 : f32
    %14 = vector.broadcast %cst : f32 to vector<8x128xf32>
    %15 = arith.maximumf %13, %14 : vector<8x128xf32>
    %c2 = arith.constant 2 : index
    %16 = memref.load %arg1[%c2] : memref<10xf32, #tpu.memory_space<smem>>
    %17 = vector.broadcast %16 : f32 to vector<8x128xf32>
    %18 = arith.mulf %1, %17 : vector<8x128xf32>
    %c3 = arith.constant 3 : index
    %19 = memref.load %arg1[%c3] : memref<10xf32, #tpu.memory_space<smem>>
    %20 = vector.broadcast %19 : f32 to vector<8x128xf32>
    %21 = arith.mulf %3, %20 : vector<8x128xf32>
    %22 = arith.addf %18, %21 : vector<8x128xf32>
    %c1_7 = arith.constant 1 : index
    %23 = memref.load %arg2[%c1_7] : memref<5xf32, #tpu.memory_space<smem>>
    %24 = vector.broadcast %23 : f32 to vector<8x128xf32>
    %25 = arith.addf %22, %24 : vector<8x128xf32>
    %cst_8 = arith.constant 0.000000e+00 : f32
    %26 = vector.broadcast %cst_8 : f32 to vector<8x128xf32>
    %27 = arith.maximumf %25, %26 : vector<8x128xf32>
    %c4 = arith.constant 4 : index
    %28 = memref.load %arg1[%c4] : memref<10xf32, #tpu.memory_space<smem>>
    %29 = vector.broadcast %28 : f32 to vector<8x128xf32>
    %30 = arith.mulf %1, %29 : vector<8x128xf32>
    %c5 = arith.constant 5 : index
    %31 = memref.load %arg1[%c5] : memref<10xf32, #tpu.memory_space<smem>>
    %32 = vector.broadcast %31 : f32 to vector<8x128xf32>
    %33 = arith.mulf %3, %32 : vector<8x128xf32>
    %34 = arith.addf %30, %33 : vector<8x128xf32>
    %c2_9 = arith.constant 2 : index
    %35 = memref.load %arg2[%c2_9] : memref<5xf32, #tpu.memory_space<smem>>
    %36 = vector.broadcast %35 : f32 to vector<8x128xf32>
    %37 = arith.addf %34, %36 : vector<8x128xf32>
    %cst_10 = arith.constant 0.000000e+00 : f32
    %38 = vector.broadcast %cst_10 : f32 to vector<8x128xf32>
    %39 = arith.maximumf %37, %38 : vector<8x128xf32>
    %c6 = arith.constant 6 : index
    %40 = memref.load %arg1[%c6] : memref<10xf32, #tpu.memory_space<smem>>
    %41 = vector.broadcast %40 : f32 to vector<8x128xf32>
    %42 = arith.mulf %1, %41 : vector<8x128xf32>
    %c7 = arith.constant 7 : index
    %43 = memref.load %arg1[%c7] : memref<10xf32, #tpu.memory_space<smem>>
    %44 = vector.broadcast %43 : f32 to vector<8x128xf32>
    %45 = arith.mulf %3, %44 : vector<8x128xf32>
    %46 = arith.addf %42, %45 : vector<8x128xf32>
    %c3_11 = arith.constant 3 : index
    %47 = memref.load %arg2[%c3_11] : memref<5xf32, #tpu.memory_space<smem>>
    %48 = vector.broadcast %47 : f32 to vector<8x128xf32>
    %49 = arith.addf %46, %48 : vector<8x128xf32>
    %cst_12 = arith.constant 0.000000e+00 : f32
    %50 = vector.broadcast %cst_12 : f32 to vector<8x128xf32>
    %51 = arith.maximumf %49, %50 : vector<8x128xf32>
    %c8 = arith.constant 8 : index
    %52 = memref.load %arg1[%c8] : memref<10xf32, #tpu.memory_space<smem>>
    %53 = vector.broadcast %52 : f32 to vector<8x128xf32>
    %54 = arith.mulf %1, %53 : vector<8x128xf32>
    %c9 = arith.constant 9 : index
    %55 = memref.load %arg1[%c9] : memref<10xf32, #tpu.memory_space<smem>>
    %56 = vector.broadcast %55 : f32 to vector<8x128xf32>
    %57 = arith.mulf %3, %56 : vector<8x128xf32>
    %58 = arith.addf %54, %57 : vector<8x128xf32>
    %c4_13 = arith.constant 4 : index
    %59 = memref.load %arg2[%c4_13] : memref<5xf32, #tpu.memory_space<smem>>
    %60 = vector.broadcast %59 : f32 to vector<8x128xf32>
    %61 = arith.addf %58, %60 : vector<8x128xf32>
    %cst_14 = arith.constant 0.000000e+00 : f32
    %62 = vector.broadcast %cst_14 : f32 to vector<8x128xf32>
    %63 = arith.maximumf %61, %62 : vector<8x128xf32>
    %c0_15 = arith.constant 0 : index
    %64 = memref.load %arg3[%c0_15] : memref<25xf32, #tpu.memory_space<smem>>
    %65 = vector.broadcast %64 : f32 to vector<8x128xf32>
    %66 = arith.mulf %15, %65 : vector<8x128xf32>
    %c1_16 = arith.constant 1 : index
    %67 = memref.load %arg3[%c1_16] : memref<25xf32, #tpu.memory_space<smem>>
    %68 = vector.broadcast %67 : f32 to vector<8x128xf32>
    %69 = arith.mulf %27, %68 : vector<8x128xf32>
    %70 = arith.addf %66, %69 : vector<8x128xf32>
    %c2_17 = arith.constant 2 : index
    %71 = memref.load %arg3[%c2_17] : memref<25xf32, #tpu.memory_space<smem>>
    %72 = vector.broadcast %71 : f32 to vector<8x128xf32>
    %73 = arith.mulf %39, %72 : vector<8x128xf32>
    %74 = arith.addf %70, %73 : vector<8x128xf32>
    %c3_18 = arith.constant 3 : index
    %75 = memref.load %arg3[%c3_18] : memref<25xf32, #tpu.memory_space<smem>>
    %76 = vector.broadcast %75 : f32 to vector<8x128xf32>
    %77 = arith.mulf %51, %76 : vector<8x128xf32>
    %78 = arith.addf %74, %77 : vector<8x128xf32>
    %c4_19 = arith.constant 4 : index
    %79 = memref.load %arg3[%c4_19] : memref<25xf32, #tpu.memory_space<smem>>
    %80 = vector.broadcast %79 : f32 to vector<8x128xf32>
    %81 = arith.mulf %63, %80 : vector<8x128xf32>
    %82 = arith.addf %78, %81 : vector<8x128xf32>
    %c0_20 = arith.constant 0 : index
    %83 = memref.load %arg4[%c0_20] : memref<5xf32, #tpu.memory_space<smem>>
    %84 = vector.broadcast %83 : f32 to vector<8x128xf32>
    %85 = arith.addf %82, %84 : vector<8x128xf32>
    %cst_21 = arith.constant 0.000000e+00 : f32
    %86 = vector.broadcast %cst_21 : f32 to vector<8x128xf32>
    %87 = arith.maximumf %85, %86 : vector<8x128xf32>
    %c5_22 = arith.constant 5 : index
    %88 = memref.load %arg3[%c5_22] : memref<25xf32, #tpu.memory_space<smem>>
    %89 = vector.broadcast %88 : f32 to vector<8x128xf32>
    %90 = arith.mulf %15, %89 : vector<8x128xf32>
    %c6_23 = arith.constant 6 : index
    %91 = memref.load %arg3[%c6_23] : memref<25xf32, #tpu.memory_space<smem>>
    %92 = vector.broadcast %91 : f32 to vector<8x128xf32>
    %93 = arith.mulf %27, %92 : vector<8x128xf32>
    %94 = arith.addf %90, %93 : vector<8x128xf32>
    %c7_24 = arith.constant 7 : index
    %95 = memref.load %arg3[%c7_24] : memref<25xf32, #tpu.memory_space<smem>>
    %96 = vector.broadcast %95 : f32 to vector<8x128xf32>
    %97 = arith.mulf %39, %96 : vector<8x128xf32>
    %98 = arith.addf %94, %97 : vector<8x128xf32>
    %c8_25 = arith.constant 8 : index
    %99 = memref.load %arg3[%c8_25] : memref<25xf32, #tpu.memory_space<smem>>
    %100 = vector.broadcast %99 : f32 to vector<8x128xf32>
    %101 = arith.mulf %51, %100 : vector<8x128xf32>
    %102 = arith.addf %98, %101 : vector<8x128xf32>
    %c9_26 = arith.constant 9 : index
    %103 = memref.load %arg3[%c9_26] : memref<25xf32, #tpu.memory_space<smem>>
    %104 = vector.broadcast %103 : f32 to vector<8x128xf32>
    %105 = arith.mulf %63, %104 : vector<8x128xf32>
    %106 = arith.addf %102, %105 : vector<8x128xf32>
    %c1_27 = arith.constant 1 : index
    %107 = memref.load %arg4[%c1_27] : memref<5xf32, #tpu.memory_space<smem>>
    %108 = vector.broadcast %107 : f32 to vector<8x128xf32>
    %109 = arith.addf %106, %108 : vector<8x128xf32>
    %cst_28 = arith.constant 0.000000e+00 : f32
    %110 = vector.broadcast %cst_28 : f32 to vector<8x128xf32>
    %111 = arith.maximumf %109, %110 : vector<8x128xf32>
    %c10 = arith.constant 10 : index
    %112 = memref.load %arg3[%c10] : memref<25xf32, #tpu.memory_space<smem>>
    %113 = vector.broadcast %112 : f32 to vector<8x128xf32>
    %114 = arith.mulf %15, %113 : vector<8x128xf32>
    %c11 = arith.constant 11 : index
    %115 = memref.load %arg3[%c11] : memref<25xf32, #tpu.memory_space<smem>>
    %116 = vector.broadcast %115 : f32 to vector<8x128xf32>
    %117 = arith.mulf %27, %116 : vector<8x128xf32>
    %118 = arith.addf %114, %117 : vector<8x128xf32>
    %c12 = arith.constant 12 : index
    %119 = memref.load %arg3[%c12] : memref<25xf32, #tpu.memory_space<smem>>
    %120 = vector.broadcast %119 : f32 to vector<8x128xf32>
    %121 = arith.mulf %39, %120 : vector<8x128xf32>
    %122 = arith.addf %118, %121 : vector<8x128xf32>
    %c13 = arith.constant 13 : index
    %123 = memref.load %arg3[%c13] : memref<25xf32, #tpu.memory_space<smem>>
    %124 = vector.broadcast %123 : f32 to vector<8x128xf32>
    %125 = arith.mulf %51, %124 : vector<8x128xf32>
    %126 = arith.addf %122, %125 : vector<8x128xf32>
    %c14 = arith.constant 14 : index
    %127 = memref.load %arg3[%c14] : memref<25xf32, #tpu.memory_space<smem>>
    %128 = vector.broadcast %127 : f32 to vector<8x128xf32>
    %129 = arith.mulf %63, %128 : vector<8x128xf32>
    %130 = arith.addf %126, %129 : vector<8x128xf32>
    %c2_29 = arith.constant 2 : index
    %131 = memref.load %arg4[%c2_29] : memref<5xf32, #tpu.memory_space<smem>>
    %132 = vector.broadcast %131 : f32 to vector<8x128xf32>
    %133 = arith.addf %130, %132 : vector<8x128xf32>
    %cst_30 = arith.constant 0.000000e+00 : f32
    %134 = vector.broadcast %cst_30 : f32 to vector<8x128xf32>
    %135 = arith.maximumf %133, %134 : vector<8x128xf32>
    %c15 = arith.constant 15 : index
    %136 = memref.load %arg3[%c15] : memref<25xf32, #tpu.memory_space<smem>>
    %137 = vector.broadcast %136 : f32 to vector<8x128xf32>
    %138 = arith.mulf %15, %137 : vector<8x128xf32>
    %c16 = arith.constant 16 : index
    %139 = memref.load %arg3[%c16] : memref<25xf32, #tpu.memory_space<smem>>
    %140 = vector.broadcast %139 : f32 to vector<8x128xf32>
    %141 = arith.mulf %27, %140 : vector<8x128xf32>
    %142 = arith.addf %138, %141 : vector<8x128xf32>
    %c17 = arith.constant 17 : index
    %143 = memref.load %arg3[%c17] : memref<25xf32, #tpu.memory_space<smem>>
    %144 = vector.broadcast %143 : f32 to vector<8x128xf32>
    %145 = arith.mulf %39, %144 : vector<8x128xf32>
    %146 = arith.addf %142, %145 : vector<8x128xf32>
    %c18 = arith.constant 18 : index
    %147 = memref.load %arg3[%c18] : memref<25xf32, #tpu.memory_space<smem>>
    %148 = vector.broadcast %147 : f32 to vector<8x128xf32>
    %149 = arith.mulf %51, %148 : vector<8x128xf32>
    %150 = arith.addf %146, %149 : vector<8x128xf32>
    %c19 = arith.constant 19 : index
    %151 = memref.load %arg3[%c19] : memref<25xf32, #tpu.memory_space<smem>>
    %152 = vector.broadcast %151 : f32 to vector<8x128xf32>
    %153 = arith.mulf %63, %152 : vector<8x128xf32>
    %154 = arith.addf %150, %153 : vector<8x128xf32>
    %c3_31 = arith.constant 3 : index
    %155 = memref.load %arg4[%c3_31] : memref<5xf32, #tpu.memory_space<smem>>
    %156 = vector.broadcast %155 : f32 to vector<8x128xf32>
    %157 = arith.addf %154, %156 : vector<8x128xf32>
    %cst_32 = arith.constant 0.000000e+00 : f32
    %158 = vector.broadcast %cst_32 : f32 to vector<8x128xf32>
    %159 = arith.maximumf %157, %158 : vector<8x128xf32>
    %c20 = arith.constant 20 : index
    %160 = memref.load %arg3[%c20] : memref<25xf32, #tpu.memory_space<smem>>
    %161 = vector.broadcast %160 : f32 to vector<8x128xf32>
    %162 = arith.mulf %15, %161 : vector<8x128xf32>
    %c21 = arith.constant 21 : index
    %163 = memref.load %arg3[%c21] : memref<25xf32, #tpu.memory_space<smem>>
    %164 = vector.broadcast %163 : f32 to vector<8x128xf32>
    %165 = arith.mulf %27, %164 : vector<8x128xf32>
    %166 = arith.addf %162, %165 : vector<8x128xf32>
    %c22 = arith.constant 22 : index
    %167 = memref.load %arg3[%c22] : memref<25xf32, #tpu.memory_space<smem>>
    %168 = vector.broadcast %167 : f32 to vector<8x128xf32>
    %169 = arith.mulf %39, %168 : vector<8x128xf32>
    %170 = arith.addf %166, %169 : vector<8x128xf32>
    %c23 = arith.constant 23 : index
    %171 = memref.load %arg3[%c23] : memref<25xf32, #tpu.memory_space<smem>>
    %172 = vector.broadcast %171 : f32 to vector<8x128xf32>
    %173 = arith.mulf %51, %172 : vector<8x128xf32>
    %174 = arith.addf %170, %173 : vector<8x128xf32>
    %c24 = arith.constant 24 : index
    %175 = memref.load %arg3[%c24] : memref<25xf32, #tpu.memory_space<smem>>
    %176 = vector.broadcast %175 : f32 to vector<8x128xf32>
    %177 = arith.mulf %63, %176 : vector<8x128xf32>
    %178 = arith.addf %174, %177 : vector<8x128xf32>
    %c4_33 = arith.constant 4 : index
    %179 = memref.load %arg4[%c4_33] : memref<5xf32, #tpu.memory_space<smem>>
    %180 = vector.broadcast %179 : f32 to vector<8x128xf32>
    %181 = arith.addf %178, %180 : vector<8x128xf32>
    %cst_34 = arith.constant 0.000000e+00 : f32
    %182 = vector.broadcast %cst_34 : f32 to vector<8x128xf32>
    %183 = arith.maximumf %181, %182 : vector<8x128xf32>
    %c0_35 = arith.constant 0 : index
    %184 = memref.load %arg5[%c0_35] : memref<5xf32, #tpu.memory_space<smem>>
    %185 = vector.broadcast %184 : f32 to vector<8x128xf32>
    %186 = arith.mulf %87, %185 : vector<8x128xf32>
    %c1_36 = arith.constant 1 : index
    %187 = memref.load %arg5[%c1_36] : memref<5xf32, #tpu.memory_space<smem>>
    %188 = vector.broadcast %187 : f32 to vector<8x128xf32>
    %189 = arith.mulf %111, %188 : vector<8x128xf32>
    %190 = arith.addf %186, %189 : vector<8x128xf32>
    %c2_37 = arith.constant 2 : index
    %191 = memref.load %arg5[%c2_37] : memref<5xf32, #tpu.memory_space<smem>>
    %192 = vector.broadcast %191 : f32 to vector<8x128xf32>
    %193 = arith.mulf %135, %192 : vector<8x128xf32>
    %194 = arith.addf %190, %193 : vector<8x128xf32>
    %c3_38 = arith.constant 3 : index
    %195 = memref.load %arg5[%c3_38] : memref<5xf32, #tpu.memory_space<smem>>
    %196 = vector.broadcast %195 : f32 to vector<8x128xf32>
    %197 = arith.mulf %159, %196 : vector<8x128xf32>
    %198 = arith.addf %194, %197 : vector<8x128xf32>
    %c4_39 = arith.constant 4 : index
    %199 = memref.load %arg5[%c4_39] : memref<5xf32, #tpu.memory_space<smem>>
    %200 = vector.broadcast %199 : f32 to vector<8x128xf32>
    %201 = arith.mulf %183, %200 : vector<8x128xf32>
    %202 = arith.addf %198, %201 : vector<8x128xf32>
    %c0_40 = arith.constant 0 : index
    %203 = memref.load %arg6[%c0_40] : memref<1xf32, #tpu.memory_space<smem>>
    %204 = vector.broadcast %203 : f32 to vector<8x128xf32>
    %205 = arith.addf %202, %204 : vector<8x128xf32>
    %206 = arith.negf %205 : vector<8x128xf32>
    %207 = math.exp %206 : vector<8x128xf32>
    %cst_41 = arith.constant 1.000000e+00 : f32
    %208 = vector.broadcast %cst_41 : f32 to vector<8x128xf32>
    %209 = arith.addf %208, %207 : vector<8x128xf32>
    %210 = arith.divf %208, %209 : vector<8x128xf32>
    %c0_42 = arith.constant 0 : index
    %c0_43 = arith.constant 0 : index
    %c0_44 = arith.constant 0 : index
    %211 = vector.load %arg8[%c0_42, %c0_43, %c0_44] : memref<1x8x128xf32, #tpu.memory_space<vmem>>, vector<1x8x128xf32>
    %212 = vector.shape_cast %211 : vector<1x8x128xf32> to vector<8x128xf32>
    %213 = vector.shape_cast %210 : vector<8x128xf32> to vector<1x8x128xf32>
    tpu.vector_store %arg8[%c0_42, %c0_43, %c0_44], %213 {strides = array<i32>} : memref<1x8x128xf32, #tpu.memory_space<vmem>>, vector<1x8x128xf32>,
    return
  }
  func.func @transform_0(%arg0: i32) -> i32 {
    %c0_i32 = arith.constant 0 : i32
    %c0_i32_0 = arith.constant 0 : i32
    return %c0_i32 : i32
  }
  func.func @transform_1(%arg0: i32) -> i32 {
    %c0_i32 = arith.constant 0 : i32
    %c0_i32_0 = arith.constant 0 : i32
    return %c0_i32 : i32
  }
  func.func @transform_2(%arg0: i32) -> i32 {
    %c0_i32 = arith.constant 0 : i32
    %c0_i32_0 = arith.constant 0 : i32
    return %c0_i32 : i32
  }
  func.func @transform_3(%arg0: i32) -> i32 {
    %c0_i32 = arith.constant 0 : i32
    %c0_i32_0 = arith.constant 0 : i32
    return %c0_i32 : i32
  }
  func.func @transform_4(%arg0: i32) -> i32 {
    %c0_i32 = arith.constant 0 : i32
    %c0_i32_0 = arith.constant 0 : i32
    return %c0_i32 : i32
  }
  func.func @transform_5(%arg0: i32) -> i32 {
    %c0_i32 = arith.constant 0 : i32
    %c0_i32_0 = arith.constant 0 : i32
    return %c0_i32 : i32
  }
  func.func @transform_6(%arg0: i32) -> (i32, i32, i32) {
    %c0_i32 = arith.constant 0 : i32
    %c0_i32_0 = arith.constant 0 : i32
    %c0_i32_1 = arith.constant 0 : i32
    return %c0_i32, %arg0, %c0_i32_0 : i32, i32, i32
  }
  func.func @transform_7(%arg0: i32) -> (i32, i32, i32) {
    %c0_i32 = arith.constant 0 : i32
    %c0_i32_0 = arith.constant 0 : i32
    %c0_i32_1 = arith.constant 0 : i32
    return %c0_i32, %arg0, %c0_i32_0 : i32, i32, i32
  }
}

</mosaic_0001>

<llo_original>
// kernel: threelayer_forward.1
$region0: #{threelayer_forward.1}
  #allocation0 [shape = 'u32[]', space=smem, size = 0x4, offset = 0x4, fixed_abs, tag = 'smem constant byte address 0x4 - core index']
  #allocation1 [shape = 'u32[72,128]{1,0:T(1,128)}', space=vmem, size = 0x9000, scoped, tag = 'internal scratch']
  #allocation2 [shape = 'f32[1]{0:T(128)S(6)}', space=smem, size = 0x200, scoped, tag = 'scoped memory for threelayer_forward.1']
  %s0 = inlined_call_operand.vmem [shape: f32[10], index: 0, kind: input, shape index: {}]
  %s1 = inlined_call_operand.vmem [shape: f32[5], index: 1, kind: input, shape index: {}]
  %s2 = inlined_call_operand.vmem [shape: f32[25], index: 2, kind: input, shape index: {}]
  %s3 = inlined_call_operand.vmem [shape: f32[5], index: 3, kind: input, shape index: {}]
  %s4 = inlined_call_operand.vmem [shape: f32[5], index: 4, kind: input, shape index: {}]
  %s5 = inlined_call_operand.<no memory space> [shape: f32[1], index: 5, kind: input, shape index: {}]
  %s6 = inlined_call_operand.vmem [shape: f32[2,8,128], index: 6, kind: input, shape index: {}]
  %s7 = inlined_call_operand.vmem [shape: f32[1,8,128], index: 7, kind: output, shape index: {}]
  %s8 = sld [smem:[#allocation0]]
  $region58: #{threelayer_forward.1} parent=0
    _
  %s10 = ssub.s32 1, %s8
  %s11 = scalar_select 0, %s10, %s8
  %12 = sst [smem:[#allocation2]] %s5
  $region1: #{threelayer_forward.1} parent=0
    #allocation3 [shape = 'u8[512]{0}', space=smem, size = 0x200, scoped, tag = 'input window, operand 0, single buffered']
    #allocation4 [shape = 's32[1]{0}', space=sflag, size = 0x4, scoped, tag = 'scoped memory for threelayer_forward.1']
    #allocation5 [shape = 'u8[512]{0}', space=smem, size = 0x200, scoped, tag = 'input window, operand 1, single buffered']
    #allocation6 [shape = 's32[1]{0}', space=sflag, size = 0x4, scoped, tag = 'scoped memory for threelayer_forward.1']
    #allocation7 [shape = 'u8[512]{0}', space=smem, size = 0x200, scoped, tag = 'input window, operand 2, single buffered']
    #allocation8 [shape = 'u8[512]{0}', space=smem, size = 0x200, scoped, tag = 'input window, operand 3, single buffered']
    #allocation9 [shape = 's32[1]{0}', space=sflag, size = 0x4, scoped, tag = 'scoped memory for threelayer_forward.1']
    #allocation10 [shape = 'u8[512]{0}', space=smem, size = 0x200, scoped, tag = 'input window, operand 4, single buffered']
    %13 = vsyncpa [#allocation4], 0
    %14 = vsyncpa [#allocation6], 0
    %15 = vsyncpa [#allocation9], 0
    // Predicated region
    $region2: #{threelayer_forward.1} parent=1 // pred_check
      _
    $region3: #{threelayer_forward.1} parent=1 // pred_check_branch
      %17 = sbr.rel (0) target = $region5
    $region4: #{threelayer_forward.1} parent=1 // pred_region
      %19 = vsyncadd [#allocation4], 0
      %s21 = sshll.u32 %s0, 4
      %s22 = int_to_ptr.vmem [resolvable:$true] %s21
      %24 = dma.vmem_to_smem %s22, 16, [#allocation3], [#allocation4]
    $region5: #{threelayer_forward.1} parent=1 // pred_fallthru
      _
    // Predicated region
    $region6: #{threelayer_forward.1} parent=1 // pred_check
      _
    $region7: #{threelayer_forward.1} parent=1 // pred_check_branch
      %26 = sbr.rel (0) target = $region9
    $region8: #{threelayer_forward.1} parent=1 // pred_region
      %28 = vsyncadd [#allocation6], 0
      %s30 = sshll.u32 %s1, 4
      %s31 = int_to_ptr.vmem [resolvable:$true] %s30
      %33 = dma.vmem_to_smem %s31, 16, [#allocation5], [#allocation6]
    $region9: #{threelayer_forward.1} parent=1 // pred_fallthru
      _
    // Predicated region
    $region10: #{threelayer_forward.1} parent=1 // pred_check
      _
    $region11: #{threelayer_forward.1} parent=1 // pred_check_branch
      %35 = sbr.rel (0) target = $region13
    $region12: #{threelayer_forward.1} parent=1 // pred_region
      %37 = vsyncadd [#allocation6], 0
      %s39 = sshll.u32 %s2, 4
      %s40 = int_to_ptr.vmem [resolvable:$true] %s39
      %42 = dma.vmem_to_smem %s40, 16, [#allocation7], [#allocation6]
    $region13: #{threelayer_forward.1} parent=1 // pred_fallthru
      _
    // Predicated region
    $region14: #{threelayer_forward.1} parent=1 // pred_check
      _
    $region15: #{threelayer_forward.1} parent=1 // pred_check_branch
      %44 = sbr.rel (0) target = $region17
    $region16: #{threelayer_forward.1} parent=1 // pred_region
      %46 = vsyncadd [#allocation9], 0
      %s48 = sshll.u32 %s3, 4
      %s49 = int_to_ptr.vmem [resolvable:$true] %s48
      %51 = dma.vmem_to_smem %s49, 16, [#allocation8], [#allocation9]
    $region17: #{threelayer_forward.1} parent=1 // pred_fallthru
      _
    // Predicated region
    $region18: #{threelayer_forward.1} parent=1 // pred_check
      _
    $region19: #{threelayer_forward.1} parent=1 // pred_check_branch
      %53 = sbr.rel (0) target = $region21
    $region20: #{threelayer_forward.1} parent=1 // pred_region
      %55 = vsyncadd [#allocation9], 0
      %s57 = sshll.u32 %s4, 4
      %s58 = int_to_ptr.vmem [resolvable:$true] %s57
      %60 = dma.vmem_to_smem %s58, 16, [#allocation10], [#allocation9]
    $region21: #{threelayer_forward.1} parent=1 // pred_fallthru
      _
    // Predicated region
    $region22: #{threelayer_forward.1} parent=1 // pred_check
      _
    $region23: #{threelayer_forward.1} parent=1 // pred_check_branch
      %62 = sbr.rel (0) target = $region25
    $region24: #{threelayer_forward.1} parent=1 // pred_region
      _
    $region25: #{threelayer_forward.1} parent=1 // pred_fallthru
      _
    // Predicated region
    $region26: #{threelayer_forward.1} parent=1 // pred_check
      _
    $region27: #{threelayer_forward.1} parent=1 // pred_check_branch
      %64 = sbr.rel (0) target = $region29
    $region28: #{threelayer_forward.1} parent=1 // pred_region
      _
    $region29: #{threelayer_forward.1} parent=1 // pred_fallthru
      _
    // Predicated region
    $region30: #{threelayer_forward.1} parent=1 // pred_check
      _
    $region31: #{threelayer_forward.1} parent=1 // pred_check_branch
      %66 = sbr.rel (0) target = $region33
    $region32: #{threelayer_forward.1} parent=1 // pred_region
      %68 = dma.done [#allocation4], 16
    $region33: #{threelayer_forward.1} parent=1 // pred_fallthru
      _
    // Predicated region
    $region34: #{threelayer_forward.1} parent=1 // pred_check
      _
    $region35: #{threelayer_forward.1} parent=1 // pred_check_branch
      %70 = sbr.rel (0) target = $region37
    $region36: #{threelayer_forward.1} parent=1 // pred_region
      %72 = dma.done [#allocation6], 16
    $region37: #{threelayer_forward.1} parent=1 // pred_fallthru
      _
    // Predicated region
    $region38: #{threelayer_forward.1} parent=1 // pred_check
      _
    $region39: #{threelayer_forward.1} parent=1 // pred_check_branch
      %74 = sbr.rel (0) target = $region41
    $region40: #{threelayer_forward.1} parent=1 // pred_region
      %76 = dma.done [#allocation6], 16
    $region41: #{threelayer_forward.1} parent=1 // pred_fallthru
      _
    // Predicated region
    $region42: #{threelayer_forward.1} parent=1 // pred_check
      _
    $region43: #{threelayer_forward.1} parent=1 // pred_check_branch
      %78 = sbr.rel (0) target = $region45
    $region44: #{threelayer_forward.1} parent=1 // pred_region
      %80 = dma.done [#allocation9], 16
    $region45: #{threelayer_forward.1} parent=1 // pred_fallthru
      _
    // Predicated region
    $region46: #{threelayer_forward.1} parent=1 // pred_check
      _
    $region47: #{threelayer_forward.1} parent=1 // pred_check_branch
      %82 = sbr.rel (0) target = $region49
    $region48: #{threelayer_forward.1} parent=1 // pred_region
      %84 = dma.done [#allocation9], 16
    $region49: #{threelayer_forward.1} parent=1 // pred_fallthru
      _
    %85 = sfence
    %v86 = vld [vmem:[%s6] sm:$0xff]
    %s87 = scalar_lea.vmem %s6, 8
    %v88 = vld [vmem:[%s87] sm:$0xff]
    %s89 = sld [smem:[#allocation3]]
    %v90 = vstv %s89
    %v91 = vmul.f32 %v86, %v90
    %s92 = sld [smem:[#allocation3 + $0x1]]
    %v93 = vstv %s92
    %v94 = vmul.f32 %v88, %v93
    %v95 = vadd.f32 %v91, %v94
    %s96 = sld [smem:[#allocation5]]
    %v97 = vstv %s96
    %v98 = vadd.f32 %v95, %v97
    %v99 = vmax.f32 %v98, 0.0
    %s100 = sld [smem:[#allocation3 + $0x2]]
    %v101 = vstv %s100
    %v102 = vmul.f32 %v86, %v101
    %s103 = sld [smem:[#allocation3 + $0x3]]
    %v104 = vstv %s103
    %v105 = vmul.f32 %v88, %v104
    %v106 = vadd.f32 %v102, %v105
    %s107 = sld [smem:[#allocation5 + $0x1]]
    %v108 = vstv %s107
    %v109 = vadd.f32 %v106, %v108
    %v110 = vmax.f32 %v109, 0.0
    %s111 = sld [smem:[#allocation3 + $0x4]]
    %v112 = vstv %s111
    %v113 = vmul.f32 %v86, %v112
    %s114 = sld [smem:[#allocation3 + $0x5]]
    %v115 = vstv %s114
    %v116 = vmul.f32 %v88, %v115
    %v117 = vadd.f32 %v113, %v116
    %s118 = sld [smem:[#allocation5 + $0x2]]
    %v119 = vstv %s118
    %v120 = vadd.f32 %v117, %v119
    %v121 = vmax.f32 %v120, 0.0
    %s122 = sld [smem:[#allocation3 + $0x6]]
    %v123 = vstv %s122
    %v124 = vmul.f32 %v86, %v123
    %s125 = sld [smem:[#allocation3 + $0x7]]
    %v126 = vstv %s125
    %v127 = vmul.f32 %v88, %v126
    %v128 = vadd.f32 %v124, %v127
    %s129 = sld [smem:[#allocation5 + $0x3]]
    %v130 = vstv %s129
    %v131 = vadd.f32 %v128, %v130
    %v132 = vmax.f32 %v131, 0.0
    %s133 = sld [smem:[#allocation3 + $0x8]]
    %v134 = vstv %s133
    %v135 = vmul.f32 %v86, %v134
    %s136 = sld [smem:[#allocation3 + $0x9]]
    %v137 = vstv %s136
    %v138 = vmul.f32 %v88, %v137
    %v139 = vadd.f32 %v135, %v138
    %s140 = sld [smem:[#allocation5 + $0x4]]
    %v141 = vstv %s140
    %v142 = vadd.f32 %v139, %v141
    %v143 = vmax.f32 %v142, 0.0
    %s144 = sld [smem:[#allocation7]]
    %v145 = vstv %s144
    %v146 = vmul.f32 %v99, %v145
    %s147 = sld [smem:[#allocation7 + $0x1]]
    %v148 = vstv %s147
    %v149 = vmul.f32 %v110, %v148
    %v150 = vadd.f32 %v146, %v149
    %s151 = sld [smem:[#allocation7 + $0x2]]
    %v152 = vstv %s151
    %v153 = vmul.f32 %v121, %v152
    %v154 = vadd.f32 %v150, %v153
    %s155 = sld [smem:[#allocation7 + $0x3]]
    %v156 = vstv %s155
    %v157 = vmul.f32 %v132, %v156
    %v158 = vadd.f32 %v154, %v157
    %s159 = sld [smem:[#allocation7 + $0x4]]
    %v160 = vstv %s159
    %v161 = vmul.f32 %v143, %v160
    %v162 = vadd.f32 %v158, %v161
    %s163 = sld [smem:[#allocation8]]
    %v164 = vstv %s163
    %v165 = vadd.f32 %v162, %v164
    %v166 = vmax.f32 %v165, 0.0
    %s167 = sld [smem:[#allocation7 + $0x5]]
    %v168 = vstv %s167
    %v169 = vmul.f32 %v99, %v168
    %s170 = sld [smem:[#allocation7 + $0x6]]
    %v171 = vstv %s170
    %v172 = vmul.f32 %v110, %v171
    %v173 = vadd.f32 %v169, %v172
    %s174 = sld [smem:[#allocation7 + $0x7]]
    %v175 = vstv %s174
    %v176 = vmul.f32 %v121, %v175
    %v177 = vadd.f32 %v173, %v176
    %s178 = sld [smem:[#allocation7 + $0x8]]
    %v179 = vstv %s178
    %v180 = vmul.f32 %v132, %v179
    %v181 = vadd.f32 %v177, %v180
    %s182 = sld [smem:[#allocation7 + $0x9]]
    %v183 = vstv %s182
    %v184 = vmul.f32 %v143, %v183
    %v185 = vadd.f32 %v181, %v184
    %s186 = sld [smem:[#allocation8 + $0x1]]
    %v187 = vstv %s186
    %v188 = vadd.f32 %v185, %v187
    %v189 = vmax.f32 %v188, 0.0
    %s190 = sld [smem:[#allocation7 + $0xa]]
    %v191 = vstv %s190
    %v192 = vmul.f32 %v99, %v191
    %s193 = sld [smem:[#allocation7 + $0xb]]
    %v194 = vstv %s193
    %v195 = vmul.f32 %v110, %v194
    %v196 = vadd.f32 %v192, %v195
    %s197 = sld [smem:[#allocation7 + $0xc]]
    %v198 = vstv %s197
    %v199 = vmul.f32 %v121, %v198
    %v200 = vadd.f32 %v196, %v199
    %s201 = sld [smem:[#allocation7 + $0xd]]
    %v202 = vstv %s201
    %v203 = vmul.f32 %v132, %v202
    %v204 = vadd.f32 %v200, %v203
    %s205 = sld [smem:[#allocation7 + $0xe]]
    %v206 = vstv %s205
    %v207 = vmul.f32 %v143, %v206
    %v208 = vadd.f32 %v204, %v207
    %s209 = sld [smem:[#allocation8 + $0x2]]
    %v210 = vstv %s209
    %v211 = vadd.f32 %v208, %v210
    %v212 = vmax.f32 %v211, 0.0
    %s213 = sld [smem:[#allocation7 + $0xf]]
    %v214 = vstv %s213
    %v215 = vmul.f32 %v99, %v214
    %s216 = sld [smem:[#allocation7 + $0x10]]
    %v217 = vstv %s216
    %v218 = vmul.f32 %v110, %v217
    %v219 = vadd.f32 %v215, %v218
    %s220 = sld [smem:[#allocation7 + $0x11]]
    %v221 = vstv %s220
    %v222 = vmul.f32 %v121, %v221
    %v223 = vadd.f32 %v219, %v222
    %s224 = sld [smem:[#allocation7 + $0x12]]
    %v225 = vstv %s224
    %v226 = vmul.f32 %v132, %v225
    %v227 = vadd.f32 %v223, %v226
    %s228 = sld [smem:[#allocation7 + $0x13]]
    %v229 = vstv %s228
    %v230 = vmul.f32 %v143, %v229
    %v231 = vadd.f32 %v227, %v230
    %s232 = sld [smem:[#allocation8 + $0x3]]
    %v233 = vstv %s232
    %v234 = vadd.f32 %v231, %v233
    %v235 = vmax.f32 %v234, 0.0
    %s236 = sld [smem:[#allocation7 + $0x14]]
    %v237 = vstv %s236
    %v238 = vmul.f32 %v99, %v237
    %s239 = sld [smem:[#allocation7 + $0x15]]
    %v240 = vstv %s239
    %v241 = vmul.f32 %v110, %v240
    %v242 = vadd.f32 %v238, %v241
    %s243 = sld [smem:[#allocation7 + $0x16]]
    %v244 = vstv %s243
    %v245 = vmul.f32 %v121, %v244
    %v246 = vadd.f32 %v242, %v245
    %s247 = sld [smem:[#allocation7 + $0x17]]
    %v248 = vstv %s247
    %v249 = vmul.f32 %v132, %v248
    %v250 = vadd.f32 %v246, %v249
    %s251 = sld [smem:[#allocation7 + $0x18]]
    %v252 = vstv %s251
    %v253 = vmul.f32 %v143, %v252
    %v254 = vadd.f32 %v250, %v253
    %s255 = sld [smem:[#allocation8 + $0x4]]
    %v256 = vstv %s255
    %v257 = vadd.f32 %v254, %v256
    %v258 = vmax.f32 %v257, 0.0
    %s259 = sld [smem:[#allocation10]]
    %v260 = vstv %s259
    %v261 = vmul.f32 %v166, %v260
    %s262 = sld [smem:[#allocation10 + $0x1]]
    %v263 = vstv %s262
    %v264 = vmul.f32 %v189, %v263
    %v265 = vadd.f32 %v261, %v264
    %s266 = sld [smem:[#allocation10 + $0x2]]
    %v267 = vstv %s266
    %v268 = vmul.f32 %v212, %v267
    %v269 = vadd.f32 %v265, %v268
    %s270 = sld [smem:[#allocation10 + $0x3]]
    %v271 = vstv %s270
    %v272 = vmul.f32 %v235, %v271
    %v273 = vadd.f32 %v269, %v272
    %s274 = sld [smem:[#allocation10 + $0x4]]
    %v275 = vstv %s274
    %v276 = vmul.f32 %v258, %v275
    %v277 = vadd.f32 %v273, %v276
    %s278 = sld [smem:[#allocation2]]
    %v279 = vstv %s278
    %v280 = vadd.f32 %v277, %v279
    %v281 = vxor.u32 %v280, 2147483648
    %v282 = vmul.f32 %v281, 1.442695
    %v283 = vpow.pop %v282
    %v284 = vadd.f32 %v283, 1.0
    %v285 = vrcp.pop %v284
    %v286 = vmul.f32 %v284, %v285
    %v287 = vsub.f32 1.0, %v286
    %v288 = vmul.f32 %v285, %v287
    %v289 = vadd.f32 %v285, %v288
    %vm290 = vweird.f32 %v284
    %vm291 = vweird.f32 %v285
    %vm292 = vmor %vm290, %vm291
    %v293 = vsel %vm292, %v285, %v289
    %v294 = vand.u32 2147483647, %v284
    %vm295 = vcmp.eq.f32.partialorder %v294, 8.507059e+37
    %v296 = vand.u32 %v284, 2147483648
    %v297 = vor.u32 1.1754944e-38, %v296
    %v298 = vsel %vm295, %v297, %v293
    %v299 = vmul.f32 1.0, %v298
    %300 = vst [vmem:[%s7] sm:$0xff] %v299
    // Predicated region
    $region50: #{threelayer_forward.1} parent=1 // pred_check
      _
    $region51: #{threelayer_forward.1} parent=1 // pred_check_branch
      %302 = sbr.rel (0) target = $region53
    $region52: #{threelayer_forward.1} parent=1 // pred_region
      _
    $region53: #{threelayer_forward.1} parent=1 // pred_fallthru
      _
    // Predicated region
    $region54: #{threelayer_forward.1} parent=1 // pred_check
      _
    $region55: #{threelayer_forward.1} parent=1 // pred_check_branch
      %304 = sbr.rel (0) target = $region57
    $region56: #{threelayer_forward.1} parent=1 // pred_region
      _
    $region57: #{threelayer_forward.1} parent=1 // pred_fallthru
      _
    %305 = vsyncpa [#allocation4], 1
    %306 = vsyncpa [#allocation6], 1
    %307 = vsyncpa [#allocation9], 1

</llo_original>
